<compile_context>
chip_gen: v7x
topology: tpu7x:2x2x1
jax: 0.10.0
libtpu: 0.0.40
codegen_flags: <defaults>
</compile_context>

<pallas_src>
import jax
import jax.numpy as jnp
from jax.experimental import pallas as pl
from jax.experimental.pallas import tpu as pltpu


def _round_up(n, m):
    return (n + m - 1) // m * m


def _vae_kernel(x_ref, eps_ref,
                wenc_ref, benc_ref,
                wdec_ref, bdec_ref,
                res_ref, stats_ref):
    latent = eps_ref.shape[-1]
    tb = x_ref.shape[0]

    x = x_ref[...]                                             # (TB, 256) bf16

    # fused encoder:  [mu | logvar] = x @ [Wmu | Wlv] + [bmu | blv]  (f32 accumulate)
    enc = jnp.dot(x, wenc_ref[...],
                  preferred_element_type=jnp.float32) + benc_ref[...]
    mu = enc[:, :latent]
    logvar = enc[:, latent:]

    # reparametrize (f32 elementwise): z = eps * exp(0.5*logvar) + mu
    z = eps_ref[...] * jnp.exp(0.5 * logvar) + mu

    # fused decoder (Wd1 @ Wd2 folded offline) + exact sigmoid via tanh (1 EUP push)
    h = jnp.dot(z.astype(jnp.bfloat16), wdec_ref[...],
                preferred_element_type=jnp.float32) + bdec_ref[...]
    res_ref[...] = 0.5 * jnp.tanh(0.5 * h) + 0.5

    # pack small outputs lane-dense and write once: [ z | mu | logvar | 0-pad ] (tb,128)
    pad = stats_ref.shape[-1] - 3 * latent
    pieces = [z, enc]                                          # enc is already [mu|logvar]
    if pad:
        pieces.append(jnp.zeros((tb, pad), jnp.float32))
    stats_ref[...] = jnp.concatenate(pieces, axis=-1)


def fuse_params(params):
    """Fold/fuse the PyTorch-shaped params once, outside the kernel."""
    wmu, bmu, wlv, blv, wd1, bd1, wd2, bd2 = params
    w_enc = jnp.concatenate([wmu, wlv], axis=1).astype(jnp.bfloat16)   # (256, 64)
    b_enc = jnp.concatenate([bmu, blv], axis=1).astype(jnp.float32)    # (1, 64)
    w_dec = (wd1 @ wd2).astype(jnp.bfloat16)                           # (32, 256)
    b_dec = (bd1 @ wd2 + bd2).astype(jnp.float32)                      # (1, 256)
    return w_enc, b_enc, w_dec, b_dec


def _choose_tile(B, max_tb):
    """Batch tile: as large as allowed, multiple of 8, >=2 grid steps when batch permits."""
    b8 = _round_up(B, 8)
    tb = min(max_tb, b8)
    if b8 // tb < 2 and b8 >= 16:
        # v7x megacore: keep at least 2 grid iterations so both TensorCores get work.
        tb = _round_up(-(-b8 // 2), 8)
    return tb, _round_up(B, tb)


def vae_forward(x_nchw, eps, fused_params, *, max_block_b=2048):
    """x_nchw: (B, 1, dim, dim).  eps: (B, latent) ~ N(0,1)."""
    B = x_nchw.shape[0]
    dim = x_nchw.shape[-1]
    input_size = dim * dim
    latent = eps.shape[-1]
    w_enc, b_enc, w_dec, b_dec = fused_params

    # x goes in as bf16 (the MXU consumes bf16 anyway): halves the dominant input stream.
    x_flat = x_nchw.reshape(B, input_size).astype(jnp.bfloat16)   # == x.view(-1, 256)
    eps = eps.astype(jnp.float32)

    tb, b_pad = _choose_tile(B, max_block_b)
    if b_pad != B:
        x_flat = jnp.pad(x_flat, ((0, b_pad - B), (0, 0)))
        eps = jnp.pad(eps, ((0, b_pad - B), (0, 0)))

    stats_w = _round_up(3 * latent, 128)   # lane-dense packed [z|mu|logvar|pad]

    batched = lambda shape: pl.BlockSpec(shape, lambda i: (i, 0))
    resident = lambda shape: pl.BlockSpec(shape, lambda i: (0, 0))   # VMEM-resident

    res_flat, stats = pl.pallas_call(
        _vae_kernel,
        out_shape=(jax.ShapeDtypeStruct((b_pad, input_size), jnp.float32),
                   jax.ShapeDtypeStruct((b_pad, stats_w), jnp.float32)),
        grid=(b_pad // tb,),
        in_specs=[
            batched((tb, input_size)),              # x (bf16)
            batched((tb, latent)),                  # eps (f32)
            resident((input_size, 2 * latent)),     # [Wmu | Wlv]   bf16
            resident((1, 2 * latent)),              # [bmu | blv]   f32
            resident((latent, input_size)),         # Wd1 @ Wd2     bf16
            resident((1, input_size)),              # bd1 @ Wd2 + bd2
        ],
        out_specs=(batched((tb, input_size)),
                   batched((tb, stats_w))),
        compiler_params=pltpu.CompilerParams(
            dimension_semantics=("parallel",)),     # shard batch across TCs (v7x)
    )(x_flat, eps, w_enc, b_enc, w_dec, b_dec)

    res = res_flat[:B].reshape(B, 1, dim, dim)      # z.view(-1, 1, dim, dim)
    z = stats[:B, :latent]
    mu = stats[:B, latent:2 * latent]
    logvar = stats[:B, 2 * latent:3 * latent]
    return res, z, mu, logvar


def init_params(key, dim=16, latent_size=32):
    """Deterministic init matching the nn.Linear shapes (stored as (in, out))."""
    input_size = dim * dim
    ks = jax.random.split(key, 8)

    def linear(kw, kb, fan_in, fan_out):
        bound = 1.0 / jnp.sqrt(fan_in)      # PyTorch default U(-1/sqrt(fan_in), ...)
        w = jax.random.uniform(kw, (fan_in, fan_out), jnp.float32, -bound, bound)
        b = jax.random.uniform(kb, (1, fan_out), jnp.float32, -bound, bound)
        return w, b

    wmu, bmu = linear(ks[0], ks[1], input_size, latent_size)
    wlv, blv = linear(ks[2], ks[3], input_size, latent_size)
    wd1, bd1 = linear(ks[4], ks[5], latent_size, input_size)
    wd2, bd2 = linear(ks[6], ks[7], input_size, input_size)
    return (wmu, bmu, wlv, blv, wd1, bd1, wd2, bd2)


def _check(B, dim, latent, params, fused, key):
    k_x, k_eps = jax.random.split(key)
    x = jax.random.uniform(k_x, (B, 1, dim, dim), jnp.float32)
    eps = jax.random.normal(k_eps, (B, latent), jnp.float32)

    res, z, mu, logvar = jax.block_until_ready(
        jax.jit(vae_forward)(x, eps, fused))

    assert res.shape == (B, 1, dim, dim) and z.shape == (B, latent)
    assert mu.shape == (B, latent) and logvar.shape == (B, latent)

    xf = x.reshape(B, dim * dim)

    # Reference 1: identical fused / bf16-weight math in plain JAX (tight check).
    w_enc, b_enc, w_dec, b_dec = fused
    enc_r = jnp.dot(xf.astype(jnp.bfloat16), w_enc,
                    preferred_element_type=jnp.float32) + b_enc
    mu_r, lv_r = enc_r[:, :latent], enc_r[:, latent:]
    z_r = eps * jnp.exp(0.5 * lv_r) + mu_r
    h_r = jnp.dot(z_r.astype(jnp.bfloat16), w_dec,
                  preferred_element_type=jnp.float32) + b_dec
    res_r = jax.nn.sigmoid(h_r).reshape(B, 1, dim, dim)
    assert jnp.allclose(res, res_r, atol=2e-3)
    assert jnp.allclose(z, z_r, atol=2e-3)
    assert jnp.allclose(mu, mu_r, atol=2e-3)
    assert jnp.allclose(logvar, lv_r, atol=2e-3)

    # Reference 2: original unfused f32 PyTorch-style math (loose: bf16 weights/x in kernel).
    wmu, bmu, wlv, blv, wd1, bd1, wd2, bd2 = params
    mu_f = xf @ wmu + bmu
    lv_f = xf @ wlv + blv
    z_f = eps * jnp.exp(0.5 * lv_f) + mu_f
    res_f = jax.nn.sigmoid((z_f @ wd1 + bd1) @ wd2 + bd2).reshape(B, 1, dim, dim)
    assert jnp.allclose(res, res_f, atol=5e-2)
    assert jnp.allclose(z, z_f, atol=5e-2)
    assert jnp.allclose(mu, mu_f, atol=5e-2)
    assert jnp.allclose(logvar, lv_f, atol=5e-2)


if __name__ == "__main__":
    key = jax.random.PRNGKey(0)
    k_a, k_b, k_p = jax.random.split(key, 3)

    dim, latent = 16, 32
    params = init_params(k_p, dim=dim, latent_size=latent)
    fused = fuse_params(params)

    _check(6, dim, latent, params, fused, k_a)    # small batch: exercises padding, grid=1
    _check(40, dim, latent, params, fused, k_b)   # exercises >=2 grid steps (megacore path)

    print("KERNEL_OK")
</pallas_src>

<mosaic_0001>
module attributes {stable_mosaic.version = 11 : i64} {
  func.func @_vae_kernel(%arg0: i32, %arg1: memref<8x256xbf16, #tpu.memory_space<vmem>>, %arg2: memref<8x32xf32, #tpu.memory_space<vmem>>, %arg3: memref<256x64xbf16, #tpu.memory_space<vmem>>, %arg4: memref<1x64xf32, #tpu.memory_space<vmem>>, %arg5: memref<32x256xbf16, #tpu.memory_space<vmem>>, %arg6: memref<1x256xf32, #tpu.memory_space<vmem>>, %arg7: memref<8x256xf32, #tpu.memory_space<vmem>>, %arg8: memref<8x128xf32, #tpu.memory_space<vmem>>) attributes {dimension_semantics = [#tpu.dimension_semantics<parallel>], iteration_bounds = array<i64: 1>, scalar_prefetch = 0 : i64, scratch_operands = 0 : i64, tpu.core_type = #tpu.core_type<tc>, window_params = [{transform_indices = @transform_0, window_bounds = array<i64: 8, 256>}, {transform_indices = @transform_1, window_bounds = array<i64: 8, 32>}, {pipeline_mode = #tpu.pipeline_mode<synchronous>, transform_indices = @transform_2, window_bounds = array<i64: 256, 64>}, {pipeline_mode = #tpu.pipeline_mode<synchronous>, transform_indices = @transform_3, window_bounds = array<i64: 1, 64>}, {pipeline_mode = #tpu.pipeline_mode<synchronous>, transform_indices = @transform_4, window_bounds = array<i64: 32, 256>}, {pipeline_mode = #tpu.pipeline_mode<synchronous>, transform_indices = @transform_5, window_bounds = array<i64: 1, 256>}, {transform_indices = @transform_6, window_bounds = array<i64: 8, 256>}, {transform_indices = @transform_7, window_bounds = array<i64: 8, 128>}]} {
    %c0 = arith.constant 0 : index
    %c0_0 = arith.constant 0 : index
    %0 = vector.load %arg1[%c0, %c0_0] : memref<8x256xbf16, #tpu.memory_space<vmem>>, vector<8x256xbf16>
    %c0_1 = arith.constant 0 : index
    %c0_2 = arith.constant 0 : index
    %1 = vector.load %arg3[%c0_1, %c0_2] : memref<256x64xbf16, #tpu.memory_space<vmem>>, vector<256x64xbf16>
    %cst = arith.constant dense<0.000000e+00> : vector<8x64xf32>
    %2 = tpu.matmul %0, %1, %cst {dimension_numbers = #tpu.dot_dimension_numbers<[1], [0], [0], [1], [0, 0, 1, 1], [], []>} : vector<8x256xbf16>, vector<256x64xbf16>, vector<8x64xf32> -> vector<8x64xf32>
    %c0_3 = arith.constant 0 : index
    %c0_4 = arith.constant 0 : index
    %3 = vector.load %arg4[%c0_3, %c0_4] : memref<1x64xf32, #tpu.memory_space<vmem>>, vector<1x64xf32>
    %4 = vector.broadcast %3 : vector<1x64xf32> to vector<8x64xf32>
    %5 = arith.addf %2, %4 : vector<8x64xf32>
    %6 = vector.extract_strided_slice %5 {offsets = [0, 0], sizes = [8, 32], strides = [1, 1]} : vector<8x64xf32> to vector<8x32xf32>
    %7 = vector.extract_strided_slice %5 {offsets = [0, 32], sizes = [8, 32], strides = [1, 1]} : vector<8x64xf32> to vector<8x32xf32>
    %c0_5 = arith.constant 0 : index
    %c0_6 = arith.constant 0 : index
    %8 = vector.load %arg2[%c0_5, %c0_6] : memref<8x32xf32, #tpu.memory_space<vmem>>, vector<8x32xf32>
    %cst_7 = arith.constant 5.000000e-01 : f32
    %9 = vector.broadcast %cst_7 : f32 to vector<8x32xf32>
    %10 = arith.mulf %9, %7 : vector<8x32xf32>
    %11 = math.exp %10 : vector<8x32xf32>
    %12 = arith.mulf %8, %11 : vector<8x32xf32>
    %13 = arith.addf %12, %6 : vector<8x32xf32>
    %14 = arith.truncf %13 : vector<8x32xf32> to vector<8x32xbf16>
    %c0_8 = arith.constant 0 : index
    %c0_9 = arith.constant 0 : index
    %15 = vector.load %arg5[%c0_8, %c0_9] : memref<32x256xbf16, #tpu.memory_space<vmem>>, vector<32x256xbf16>
    %cst_10 = arith.constant dense<0.000000e+00> : vector<8x256xf32>
    %16 = tpu.matmul %14, %15, %cst_10 {dimension_numbers = #tpu.dot_dimension_numbers<[1], [0], [0], [1], [0, 0, 1, 1], [], []>} : vector<8x32xbf16>, vector<32x256xbf16>, vector<8x256xf32> -> vector<8x256xf32>
    %c0_11 = arith.constant 0 : index
    %c0_12 = arith.constant 0 : index
    %17 = vector.load %arg6[%c0_11, %c0_12] : memref<1x256xf32, #tpu.memory_space<vmem>>, vector<1x256xf32>
    %18 = vector.broadcast %17 : vector<1x256xf32> to vector<8x256xf32>
    %19 = arith.addf %16, %18 : vector<8x256xf32>
    %cst_13 = arith.constant 5.000000e-01 : f32
    %20 = vector.broadcast %cst_13 : f32 to vector<8x256xf32>
    %21 = arith.mulf %20, %19 : vector<8x256xf32>
    %22 = math.tanh %21 : vector<8x256xf32>
    %cst_14 = arith.constant 5.000000e-01 : f32
    %23 = vector.broadcast %cst_14 : f32 to vector<8x256xf32>
    %24 = arith.mulf %23, %22 : vector<8x256xf32>
    %cst_15 = arith.constant 5.000000e-01 : f32
    %25 = vector.broadcast %cst_15 : f32 to vector<8x256xf32>
    %26 = arith.addf %24, %25 : vector<8x256xf32>
    %c0_16 = arith.constant 0 : index
    %c0_17 = arith.constant 0 : index
    %27 = vector.load %arg7[%c0_16, %c0_17] : memref<8x256xf32, #tpu.memory_space<vmem>>, vector<8x256xf32>
    tpu.vector_store %arg7[%c0_16, %c0_17], %26 {strides = array<i32>} : memref<8x256xf32, #tpu.memory_space<vmem>>, vector<8x256xf32>,
    %cst_18 = arith.constant 0.000000e+00 : f32
    %28 = vector.broadcast %cst_18 : f32 to vector<8x32xf32>
    %29 = tpu.concatenate %13, %5, %28 in 1 : vector<8x32xf32>, vector<8x64xf32>, vector<8x32xf32> -> vector<8x128xf32>
    %c0_19 = arith.constant 0 : index
    %c0_20 = arith.constant 0 : index
    %30 = vector.load %arg8[%c0_19, %c0_20] : memref<8x128xf32, #tpu.memory_space<vmem>>, vector<8x128xf32>
    tpu.vector_store %arg8[%c0_19, %c0_20], %29 {strides = array<i32>} : memref<8x128xf32, #tpu.memory_space<vmem>>, vector<8x128xf32>,
    return
  }
  func.func @transform_0(%arg0: i32) -> (i32, i32) {
    %c0_i32 = arith.constant 0 : i32
    %c0_i32_0 = arith.constant 0 : i32
    return %arg0, %c0_i32 : i32, i32
  }
  func.func @transform_1(%arg0: i32) -> (i32, i32) {
    %c0_i32 = arith.constant 0 : i32
    %c0_i32_0 = arith.constant 0 : i32
    return %arg0, %c0_i32 : i32, i32
  }
  func.func @transform_2(%arg0: i32) -> (i32, i32) {
    %c0_i32 = arith.constant 0 : i32
    %c0_i32_0 = arith.constant 0 : i32
    %c0_i32_1 = arith.constant 0 : i32
    return %c0_i32, %c0_i32_0 : i32, i32
  }
  func.func @transform_3(%arg0: i32) -> (i32, i32) {
    %c0_i32 = arith.constant 0 : i32
    %c0_i32_0 = arith.constant 0 : i32
    %c0_i32_1 = arith.constant 0 : i32
    return %c0_i32, %c0_i32_0 : i32, i32
  }
  func.func @transform_4(%arg0: i32) -> (i32, i32) {
    %c0_i32 = arith.constant 0 : i32
    %c0_i32_0 = arith.constant 0 : i32
    %c0_i32_1 = arith.constant 0 : i32
    return %c0_i32, %c0_i32_0 : i32, i32
  }
  func.func @transform_5(%arg0: i32) -> (i32, i32) {
    %c0_i32 = arith.constant 0 : i32
    %c0_i32_0 = arith.constant 0 : i32
    %c0_i32_1 = arith.constant 0 : i32
    return %c0_i32, %c0_i32_0 : i32, i32
  }
  func.func @transform_6(%arg0: i32) -> (i32, i32) {
    %c0_i32 = arith.constant 0 : i32
    %c0_i32_0 = arith.constant 0 : i32
    return %arg0, %c0_i32 : i32, i32
  }
  func.func @transform_7(%arg0: i32) -> (i32, i32) {
    %c0_i32 = arith.constant 0 : i32
    %c0_i32_0 = arith.constant 0 : i32
    return %arg0, %c0_i32 : i32, i32
  }
}

</mosaic_0001>

<llo_original>
// kernel: vae_forward.1
$region0: #{vae_forward.1}
  #allocation0 [shape = 'u32[]', space=smem, size = 0x4, offset = 0x4, fixed_abs, tag = 'smem constant byte address 0x4 - core index']
  #allocation1 [shape = 'u32[144,128]{1,0:T(1,128)}', space=vmem, size = 0x12000, scoped, tag = 'internal scratch']
  %s0 = inlined_call_operand.vmem [shape: bf16[8,256], index: 0, kind: input, shape index: {}]
  %s1 = inlined_call_operand.vmem [shape: f32[8,32], index: 1, kind: input, shape index: {}]
  %s2 = inlined_call_operand.vmem [shape: bf16[256,64], index: 2, kind: input, shape index: {}]
  %s3 = inlined_call_operand.vmem [shape: f32[1,64], index: 3, kind: input, shape index: {}]
  %s4 = inlined_call_operand.vmem [shape: bf16[32,256], index: 4, kind: input, shape index: {}]
  %s5 = inlined_call_operand.vmem [shape: f32[1,256], index: 5, kind: input, shape index: {}]
  %s6 = inlined_call_operand.vmem [shape: f32[8,256], index: 6, kind: output, shape index: {0}]
  %s7 = inlined_call_operand.vmem [shape: f32[8,128], index: 7, kind: output, shape index: {1}]
  %8 = xla_tuple %s6, %s7
  %s9 = sld [smem:[#allocation0]]
  $region42: #{vae_forward.1} parent=0
    _
  %s11 = ssub.s32 1, %s9
  %s12 = scalar_select 0, %s11, %s9
  // Predicated region
  $region2: #{vae_forward.1} parent=0 // pred_check
    _
  $region3: #{vae_forward.1} parent=0 // pred_check_branch
    %14 = sbr.rel (0) target = $region5
  $region4: #{vae_forward.1} parent=0 // pred_region
    _
  $region5: #{vae_forward.1} parent=0 // pred_fallthru
    _
  // Predicated region
  $region6: #{vae_forward.1} parent=0 // pred_check
    _
  $region7: #{vae_forward.1} parent=0 // pred_check_branch
    %16 = sbr.rel (0) target = $region9
  $region8: #{vae_forward.1} parent=0 // pred_region
    _
  $region9: #{vae_forward.1} parent=0 // pred_fallthru
    _
  // Predicated region
  $region10: #{vae_forward.1} parent=0 // pred_check
    _
  $region11: #{vae_forward.1} parent=0 // pred_check_branch
    %18 = sbr.rel (0) target = $region13
  $region12: #{vae_forward.1} parent=0 // pred_region
    _
  $region13: #{vae_forward.1} parent=0 // pred_fallthru
    _
  // Predicated region
  $region14: #{vae_forward.1} parent=0 // pred_check
    _
  $region15: #{vae_forward.1} parent=0 // pred_check_branch
    %20 = sbr.rel (0) target = $region17
  $region16: #{vae_forward.1} parent=0 // pred_region
    _
  $region17: #{vae_forward.1} parent=0 // pred_fallthru
    _
  // Predicated region
  $region18: #{vae_forward.1} parent=0 // pred_check
    _
  $region19: #{vae_forward.1} parent=0 // pred_check_branch
    %22 = sbr.rel (0) target = $region21
  $region20: #{vae_forward.1} parent=0 // pred_region
    _
  $region21: #{vae_forward.1} parent=0 // pred_fallthru
    _
  // Predicated region
  $region22: #{vae_forward.1} parent=0 // pred_check
    _
  $region23: #{vae_forward.1} parent=0 // pred_check_branch
    %24 = sbr.rel (0) target = $region25
  $region24: #{vae_forward.1} parent=0 // pred_region
    _
  $region25: #{vae_forward.1} parent=0 // pred_fallthru
    _
  %v26 = vld [vmem:[%s0] sm:$0xff]
  %v27 = vld [vmem:[%s2] sm:$0xf]
  %v28 = vld [vmem:[%s2 + $0x4] sm:$0xf]
  %v29 = vld [vmem:[%s2 + $0x8] sm:$0xf]
  %v30 = vld [vmem:[%s2 + $0xc] sm:$0xf]
  %v31 = vld [vmem:[%s2 + $0x10] sm:$0xf]
  %v32 = vld [vmem:[%s2 + $0x14] sm:$0xf]
  %v33 = vld [vmem:[%s2 + $0x18] sm:$0xf]
  %v34 = vld [vmem:[%s2 + $0x1c] sm:$0xf]
  %v35 = vld [vmem:[%s2 + $0x20] sm:$0xf]
  %v36 = vld [vmem:[%s2 + $0x24] sm:$0xf]
  %v37 = vld [vmem:[%s2 + $0x28] sm:$0xf]
  %v38 = vld [vmem:[%s2 + $0x2c] sm:$0xf]
  %v39 = vld [vmem:[%s2 + $0x30] sm:$0xf]
  %v40 = vld [vmem:[%s2 + $0x34] sm:$0xf]
  %v41 = vld [vmem:[%s2 + $0x38] sm:$0xf]
  %v42 = vld [vmem:[%s2 + $0x3c] sm:$0xf]
  %v43 = vld [vmem:[%s2 + $0x40] sm:$0xf]
  %v44 = vld [vmem:[%s2 + $0x44] sm:$0xf]
  %v45 = vld [vmem:[%s2 + $0x48] sm:$0xf]
  %v46 = vld [vmem:[%s2 + $0x4c] sm:$0xf]
  %v47 = vld [vmem:[%s2 + $0x50] sm:$0xf]
  %v48 = vld [vmem:[%s2 + $0x54] sm:$0xf]
  %v49 = vld [vmem:[%s2 + $0x58] sm:$0xf]
  %v50 = vld [vmem:[%s2 + $0x5c] sm:$0xf]
  %v51 = vld [vmem:[%s2 + $0x60] sm:$0xf]
  %v52 = vld [vmem:[%s2 + $0x64] sm:$0xf]
  %v53 = vld [vmem:[%s2 + $0x68] sm:$0xf]
  %v54 = vld [vmem:[%s2 + $0x6c] sm:$0xf]
  %v55 = vld [vmem:[%s2 + $0x70] sm:$0xf]
  %v56 = vld [vmem:[%s2 + $0x74] sm:$0xf]
  %v57 = vld [vmem:[%s2 + $0x78] sm:$0xf]
  %v58 = vld [vmem:[%s2 + $0x7c] sm:$0xf]
  %v59 = vld [vmem:[%s3] sm:$0x1]
  %v61 = vlaneseq
  %v62 = vshrl.u32 %v61, 7
  %v63 = vsub.s32 0, %v62
  %v64 = vrot.slane %v59, %v63
  %v67 = vunpack.c.l.b16 %v26
  %v68 = vunpack.c.h.b16 %v26
  %v69 = vpack.c.b16 %v67, %v67
  %v70 = vpack.c.b16 %v68, %v68
  %v105 = vunpack.c.l.b16 %v27
  %v106 = vunpack.c.l.b16 %v28
  %v107 = vunpack.c.l.b16 %v29
  %v108 = vunpack.c.l.b16 %v30
  %v109 = vunpack.c.l.b16 %v31
  %v110 = vunpack.c.l.b16 %v32
  %v111 = vunpack.c.l.b16 %v33
  %v112 = vunpack.c.l.b16 %v34
  %v113 = vunpack.c.l.b16 %v35
  %v114 = vunpack.c.l.b16 %v36
  %v115 = vunpack.c.l.b16 %v37
  %v116 = vunpack.c.l.b16 %v38
  %v117 = vunpack.c.l.b16 %v39
  %v118 = vunpack.c.l.b16 %v40
  %v119 = vunpack.c.l.b16 %v41
  %v120 = vunpack.c.l.b16 %v42
  %v121 = vunpack.c.l.b16 %v43
  %v122 = vunpack.c.l.b16 %v44
  %v123 = vunpack.c.l.b16 %v45
  %v124 = vunpack.c.l.b16 %v46
  %v125 = vunpack.c.l.b16 %v47
  %v126 = vunpack.c.l.b16 %v48
  %v127 = vunpack.c.l.b16 %v49
  %v128 = vunpack.c.l.b16 %v50
  %v129 = vunpack.c.l.b16 %v51
  %v130 = vunpack.c.l.b16 %v52
  %v131 = vunpack.c.l.b16 %v53
  %v132 = vunpack.c.l.b16 %v54
  %v133 = vunpack.c.l.b16 %v55
  %v134 = vunpack.c.l.b16 %v56
  %v135 = vunpack.c.l.b16 %v57
  %v136 = vunpack.c.l.b16 %v58
  %v137 = vpack.c.b16 %v106, %v105
  %v138 = vpack.c.b16 %v108, %v107
  %v139 = vpack.c.b16 %v110, %v109
  %v140 = vpack.c.b16 %v112, %v111
  %v141 = vpack.c.b16 %v114, %v113
  %v142 = vpack.c.b16 %v116, %v115
  %v143 = vpack.c.b16 %v118, %v117
  %v144 = vpack.c.b16 %v120, %v119
  %v145 = vpack.c.b16 %v122, %v121
  %v146 = vpack.c.b16 %v124, %v123
  %v147 = vpack.c.b16 %v126, %v125
  %v148 = vpack.c.b16 %v128, %v127
  %v149 = vpack.c.b16 %v130, %v129
  %v150 = vpack.c.b16 %v132, %v131
  %v151 = vpack.c.b16 %v134, %v133
  %v152 = vpack.c.b16 %v136, %v135
  %169 = vmatprep.subr.bf16.mxu0 0
  %170 = vmatpush1.bf16.msra.mxu0 %v137
  %171 = vmatprep.subr.bf16.mxu0 0
  %172 = vmatpush1.bf16.msra.mxu0 %v138
  %173 = vmatprep.subr.bf16.mxu0 0
  %174 = vmatpush1.bf16.msra.mxu0 %v139
  %175 = vmatprep.subr.bf16.mxu0 0
  %176 = vmatpush1.bf16.msra.mxu0 %v140
  %177 = vmatprep.subr.bf16.mxu0 0
  %178 = vmatpush1.bf16.msra.mxu0 %v141
  %179 = vmatprep.subr.bf16.mxu0 0
  %180 = vmatpush1.bf16.msra.mxu0 %v142
  %181 = vmatprep.subr.bf16.mxu0 0
  %182 = vmatpush1.bf16.msra.mxu0 %v143
  %183 = vmatprep.subr.bf16.mxu0 0
  %184 = vmatpush1.bf16.msra.mxu0 %v144
  %185 = vmatprep.subr.bf16.mxu0 0
  %186 = vmatpush1.bf16.msra.mxu0 %v145
  %187 = vmatprep.subr.bf16.mxu0 0
  %188 = vmatpush1.bf16.msra.mxu0 %v146
  %189 = vmatprep.subr.bf16.mxu0 0
  %190 = vmatpush1.bf16.msra.mxu0 %v147
  %191 = vmatprep.subr.bf16.mxu0 0
  %192 = vmatpush1.bf16.msra.mxu0 %v148
  %193 = vmatprep.subr.bf16.mxu0 0
  %194 = vmatpush1.bf16.msra.mxu0 %v149
  %195 = vmatprep.subr.bf16.mxu0 0
  %196 = vmatpush1.bf16.msra.mxu0 %v150
  %197 = vmatprep.subr.bf16.mxu0 0
  %198 = vmatpush1.bf16.msra.mxu0 %v151
  %199 = vmatprep.subr.bf16.mxu0 0
  %200 = vmatpush1.bf16.msra.mxu0 %v152
  %201 = vmatprep.mubr.bf16.mxu0 %v70
  %202 = vmatmul.mubr.bf16.gmra.mrb[0].mxu0 %v69
  %v203 = vpop.f32.mrb[0].mxu0
  %v204 = vadd.f32 %v64, %v203
  %v205 = vpop.f32.mrb[0].mxu0
  %v206 = vpop.f32.mrb[0].mxu0
  %v207 = vpop.f32.mrb[0].mxu0
  %208 = vdwg.mxu0
  %v209 = vld [vmem:[%s1] sm:$0xff]
  %v210 = vmul.f32 %v204, 0.5
  %v211 = vmul.f32 %v210, 1.442695
  %v212 = vpow.pop %v211
  %214 = vrot.lane.b32.xlu0 %v212, 96
  %v215 = vpop.permute.xlu0 %214
  %v217 = vmul.f32 %v209, %v215
  %v218 = vadd.f32 %v217, %v204
  %v219 = vpack.c.bf16 %v218, %v218
  %v220 = vld [vmem:[%s4] sm:$0xff]
  %v221 = vld [vmem:[%s4 + $0x8] sm:$0xff]
  %v222 = vld [vmem:[%s4 + $0x10] sm:$0xff]
  %v223 = vld [vmem:[%s4 + $0x18] sm:$0xff]
  %v224 = vld [vmem:[%s5] sm:$0x3]
  %v226 = vlaneseq
  %v227 = vshrl.u32 %v226, 7
  %v228 = vsub.s32 0, %v227
  %v229 = vrot.slane %v224, %v228
  %v230 = vlaneseq
  %v231 = vshrl.u32 %v230, 7
  %v232 = vsub.s32 1, %v231
  %v233 = vrot.slane %v224, %v232
  %v240 = vunpack.c.l.b16 %v220
  %v241 = vunpack.c.h.b16 %v220
  %v242 = vunpack.c.l.b16 %v221
  %v243 = vunpack.c.h.b16 %v221
  %v244 = vunpack.c.l.b16 %v222
  %v245 = vunpack.c.h.b16 %v222
  %v246 = vunpack.c.l.b16 %v223
  %v247 = vunpack.c.h.b16 %v223
  %v248 = vpack.c.b16 %v242, %v240
  %v249 = vpack.c.b16 %v243, %v241
  %v250 = vpack.c.b16 %v246, %v244
  %v251 = vpack.c.b16 %v247, %v245
  %vm256 = vcmask 261120
  %v258 = vsel %vm256, %v219, 0
  %260 = vmatprep.subr.bf16.mxu0 %v249
  %261 = vmatpush1.bf16.msra.mxu0 %v248
  %262 = vmatprep.subr.bf16.mxu0 %v251
  %263 = vmatpush1.bf16.msra.mxu0 %v250
  %264 = vmatprep.subr.bf16.mxu0 0
  %265 = vmatpush1.bf16.msra.mxu0 0
  %266 = vmatprep.subr.bf16.mxu0 0
  %267 = vmatpush1.bf16.msra.mxu0 0
  %268 = vmatprep.subr.bf16.mxu0 0
  %269 = vmatpush1.bf16.msra.mxu0 0
  %270 = vmatprep.subr.bf16.mxu0 0
  %271 = vmatpush1.bf16.msra.mxu0 0
  %272 = vmatprep.subr.bf16.mxu0 0
  %273 = vmatpush1.bf16.msra.mxu0 0
  %274 = vmatprep.subr.bf16.mxu0 0
  %275 = vmatpush1.bf16.msra.mxu0 0
  %276 = vmatprep.subr.bf16.mxu0 0
  %277 = vmatpush1.bf16.msra.mxu0 0
  %278 = vmatprep.subr.bf16.mxu0 0
  %279 = vmatpush1.bf16.msra.mxu0 0
  %280 = vmatprep.subr.bf16.mxu0 0
  %281 = vmatpush1.bf16.msra.mxu0 0
  %282 = vmatprep.subr.bf16.mxu0 0
  %283 = vmatpush1.bf16.msra.mxu0 0
  %284 = vmatprep.subr.bf16.mxu0 0
  %285 = vmatpush1.bf16.msra.mxu0 0
  %286 = vmatprep.subr.bf16.mxu0 0
  %287 = vmatpush1.bf16.msra.mxu0 0
  %288 = vmatprep.subr.bf16.mxu0 0
  %289 = vmatpush1.bf16.msra.mxu0 0
  %290 = vmatprep.subr.bf16.mxu0 0
  %291 = vmatpush1.bf16.msra.mxu0 0
  %292 = vmatprep.mubr.bf16.mxu0 0
  %293 = vmatmul.mubr.bf16.gmra.mrb[0].mxu0 %v258
  %v294 = vpop.f32.mrb[0].mxu0
  %v295 = vadd.f32 %v229, %v294
  %v296 = vpop.f32.mrb[0].mxu0
  %v297 = vadd.f32 %v233, %v296
  %v298 = vpop.f32.mrb[0].mxu0
  %v299 = vpop.f32.mrb[0].mxu0
  %300 = vdwg.mxu0
  %v301 = vmul.f32 %v295, 0.5
  %v302 = vmul.f32 %v297, 0.5
  %v303 = vtanh.pop %v301
  %v304 = vtanh.pop %v302
  %v305 = vmul.f32 %v303, 0.5
  %v306 = vmul.f32 %v304, 0.5
  %v307 = vadd.f32 %v305, 0.5
  %v308 = vadd.f32 %v306, 0.5
  %309 = vst [vmem:[%s6] sm:$0xff] %v307
  %310 = vst [vmem:[%s6 + $0x8] sm:$0xff] %v308
  %312 = vrot.lane.b32.xlu0 %v204, 32
  %v313 = vpop.permute.xlu0 %312
  %v315 = vsel %vm256, %v218, %v313
  %vm316 = vcmask 785408
  %v317 = vsel %vm316, %v315, 0.0
  %318 = vst [vmem:[%s7] sm:$0xff] %v317
  // Predicated region
  $region26: #{vae_forward.1} parent=0 // pred_check
    _
  $region27: #{vae_forward.1} parent=0 // pred_check_branch
    %320 = sbr.rel (0) target = $region29
  $region28: #{vae_forward.1} parent=0 // pred_region
    _
  $region29: #{vae_forward.1} parent=0 // pred_fallthru
    _
  // Predicated region
  $region30: #{vae_forward.1} parent=0 // pred_check
    _
  $region31: #{vae_forward.1} parent=0 // pred_check_branch
    %322 = sbr.rel (0) target = $region33
  $region32: #{vae_forward.1} parent=0 // pred_region
    _
  $region33: #{vae_forward.1} parent=0 // pred_fallthru
    _
  // Predicated region
  $region34: #{vae_forward.1} parent=0 // pred_check
    _
  $region35: #{vae_forward.1} parent=0 // pred_check_branch
    %324 = sbr.rel (0) target = $region37
  $region36: #{vae_forward.1} parent=0 // pred_region
    _
  $region37: #{vae_forward.1} parent=0 // pred_fallthru
    _
  // Predicated region
  $region38: #{vae_forward.1} parent=0 // pred_check
    _
  $region39: #{vae_forward.1} parent=0 // pred_check_branch
    %326 = sbr.rel (0) target = $region41
  $region40: #{vae_forward.1} parent=0 // pred_region
    _
  $region41: #{vae_forward.1} parent=0 // pred_fallthru
    _

</llo_original>
